<compile_context>
chip_gen: v7x
topology: tpu7x:2x2x1
jax: 0.10.0
libtpu: 0.0.40
codegen_flags: <defaults>
</compile_context>

<pallas_src>
import math
import functools

import jax
import jax.numpy as jnp
import numpy as np
from jax.experimental import pallas as pl
from jax.experimental.pallas import tpu as pltpu


def _round_up(x, m):
    return (x + m - 1) // m * m


def _modconv_kernel(style_ref, patches_ref, modwT_ref, modb_ref, w_ref, wsq_ref,
                    bias_ref, out_ref, *, demodulate, fused_bias_act,
                    compute_dtype, neg_slope, act_scale, eps):
    # ---- EqualLinear modulation -> per-(kk, c_in) style ROW (tiny MXU matvec) ----
    # modwT_ref is (S, KK*C_in): the EqualLinear weight (already * 1/sqrt(S)),
    # transposed and tiled across the KK kernel taps so the result broadcasts
    # directly over the lane (KK*C_in) axis of the patches tile.
    s_row = style_ref[0]                                               # (1, S)   f32
    style_row = (jnp.dot(s_row, modwT_ref[...],
                         preferred_element_type=jnp.float32)
                 + modb_ref[...])                                      # (1, KKC) f32

    # ---- modulate the PATCHES (one vmul per loaded vreg; hidden under the MXU) ----
    xm = patches_ref[0] * style_row.astype(compute_dtype)              # (TP, KKC)

    # ---- the convolution: ONE MXU matmul over K = KK*C_in ----
    acc = jnp.dot(xm, w_ref[...],
                  preferred_element_type=jnp.float32)                  # (TP, C_out_p) f32

    if demodulate:
        # d2[oc] = sum_kkc (scale*W[kkc,oc])^2 * style_row[kkc]^2   (tiny MXU matvec)
        sr2 = (style_row * style_row).astype(wsq_ref.dtype)            # (1, KKC)
        d2 = jnp.dot(sr2, wsq_ref[...],
                     preferred_element_type=jnp.float32)               # (1, C_out_p)
        acc = acc * jax.lax.rsqrt(d2 + eps)                            # per-out-channel

    if fused_bias_act:
        acc = acc + bias_ref[...]
        acc = jnp.where(acc >= 0, acc, neg_slope * acc) * act_scale
    out_ref[0] = acc.astype(out_ref.dtype)


def modulated_conv2d_forward(x, style, params, *, demodulate=True,
                             fused_bias_act=True,
                             compute_dtype=jnp.bfloat16, tile_p=256,
                             vmem_limit_bytes=64 * 1024 * 1024):
    """x: (B, C_in, H, W) NCHW f32; style: (B, style_dim) f32 (global latent)."""
    assert style.ndim == 2, (
        "TODO(synk): style.ndim == 4 spatially-varying path not implemented")
    B, C_in, H, W = x.shape
    S = style.shape[1]
    conv_w = jnp.asarray(params['conv_weight'], jnp.float32)           # (C_out, C_in, k, k)
    C_out, _, k, _ = conv_w.shape
    H_out, W_out = H - k + 1, W - k + 1                                # stride=1, padding=0
    P, KK = H_out * W_out, k * k
    KKC = KK * C_in
    C_out_p = _round_up(C_out, 128)        # lane-dense output stores

    conv_scale = 1.0 / math.sqrt(C_in * k * k)
    mod_scale = 1.0 / math.sqrt(S)         # EqualLinear scale (lr_mul = 1)

    # ---- im2col (glue): (B, P, KK*C_in), kk-major / in_channel-minor ----
    # NOTE: reads k^2 x the activation bytes from HBM; see module TODO.
    cols = []
    for ky in range(k):
        for kx in range(k):
            cols.append(x[:, :, ky:ky + H_out, kx:kx + W_out])         # (B, C_in, Ho, Wo)
    patches = jnp.stack(cols, axis=2)                                  # (B, C_in, KK, Ho, Wo)
    patches = patches.transpose(0, 3, 4, 2, 1).reshape(B, P, KKC)

    # ---- spatial (P) tiling ----
    tp = max(8, min(_round_up(tile_p, 8), _round_up(P, 8)))
    P_pad = _round_up(P, tp)
    if P_pad != P:
        patches = jnp.pad(patches, ((0, 0), (0, P_pad - P), (0, 0)))
    patches = patches.astype(compute_dtype)
    n_p = P_pad // tp

    # ---- parameter re-layouts (glue); constant scales pre-folded ----
    # w_flat[kk*C_in + ci, oc] = conv_scale * W[oc, ci, ky, kx]   (kk = ky*k + kx)
    w_flat_f32 = conv_w.transpose(2, 3, 1, 0).reshape(KKC, C_out) * conv_scale
    w_flat_f32 = jnp.pad(w_flat_f32, ((0, 0), (0, C_out_p - C_out)))   # (KKC, C_out_p)
    w_flat = w_flat_f32.astype(compute_dtype)
    w_sq = (w_flat_f32 * w_flat_f32).astype(compute_dtype)             # for demod matvec

    modwT = jnp.tile(
        (jnp.asarray(params['mod_weight'], jnp.float32) * mod_scale).T, (1, KK))  # (S, KKC)
    modb = jnp.tile(
        jnp.asarray(params['mod_bias'], jnp.float32).reshape(1, C_in), (1, KK))   # (1, KKC)

    if fused_bias_act:
        bias = jnp.asarray(params['act_bias'], jnp.float32)
    else:
        bias = jnp.zeros((C_out,), jnp.float32)
    bias = jnp.pad(bias, (0, C_out_p - C_out)).reshape(1, C_out_p)
    style3 = jnp.asarray(style, jnp.float32).reshape(B, 1, S)

    kernel = functools.partial(
        _modconv_kernel,
        demodulate=demodulate, fused_bias_act=fused_bias_act,
        compute_dtype=compute_dtype,
        neg_slope=0.2, act_scale=math.sqrt(2.0), eps=1e-8)

    out = pl.pallas_call(
        kernel,
        out_shape=jax.ShapeDtypeStruct((B, P_pad, C_out_p), jnp.float32),
        grid_spec=pltpu.PrefetchScalarGridSpec(
            num_scalar_prefetch=0,
            grid=(B, n_p),
            in_specs=[
                pl.BlockSpec((1, 1, S), lambda b, p: (b, 0, 0)),        # style row (f32)
                pl.BlockSpec((1, tp, KKC), lambda b, p: (b, p, 0)),     # patches tile (compute dt)
                pl.BlockSpec((S, KKC), lambda b, p: (0, 0)),            # EqualLinear W^T (tiled, f32)
                pl.BlockSpec((1, KKC), lambda b, p: (0, 0)),            # EqualLinear bias (tiled, f32)
                pl.BlockSpec((KKC, C_out_p), lambda b, p: (0, 0)),      # conv_scale * W (flat)
                pl.BlockSpec((KKC, C_out_p), lambda b, p: (0, 0)),      # (conv_scale * W)^2 (flat)
                pl.BlockSpec((1, C_out_p), lambda b, p: (0, 0)),        # epilogue bias (or zeros)
            ],
            out_specs=pl.BlockSpec((1, tp, C_out_p), lambda b, p: (b, p, 0)),
        ),
        compiler_params=pltpu.CompilerParams(
            dimension_semantics=("parallel", "parallel"),
            vmem_limit_bytes=vmem_limit_bytes),
    )(style3, patches, modwT, modb, w_flat, w_sq, bias)

    out = out[:, :P, :C_out].reshape(B, H_out, W_out, C_out)
    return out.transpose(0, 3, 1, 2)                                   # NCHW, matches PyTorch


def ref_forward(x, style, params, *, demodulate=True, fused_bias_act=True):
    """Pure-JAX f32 reference replicating the PyTorch semantics."""
    conv_w = params['conv_weight']
    C_out, C_in, k, _ = conv_w.shape
    B, _, H, W = x.shape
    S = style.shape[1]
    H_out, W_out = H - k + 1, W - k + 1
    conv_scale = 1.0 / math.sqrt(C_in * k * k)
    mod_scale = 1.0 / math.sqrt(S)

    style_mod = style @ (params['mod_weight'] * mod_scale).T + params['mod_bias']   # (B, C_in)
    w = conv_scale * conv_w[None] * style_mod[:, None, :, None, None]               # (B,Co,Ci,k,k)
    if demodulate:
        demod = jax.lax.rsqrt(jnp.sum(w * w, axis=(2, 3, 4)) + 1e-8)
        w = w * demod[:, :, None, None, None]

    out = jnp.zeros((B, C_out, H_out, W_out), jnp.float32)
    for ky in range(k):
        for kx in range(k):
            out = out + jnp.einsum('boi,bihw->bohw', w[:, :, :, ky, kx],
                                   x[:, :, ky:ky + H_out, kx:kx + W_out])
    if fused_bias_act:
        out = out + params['act_bias'].reshape(1, C_out, 1, 1)
        out = jnp.where(out >= 0, out, 0.2 * out) * math.sqrt(2.0)
    return out


if __name__ == "__main__":
    key = jax.random.PRNGKey(0)
    B, C_in, C_out, H, W, k, S = 2, 4, 8, 16, 16, 3, 8
    k1, k2, k3, k4, k5 = jax.random.split(key, 5)

    x = jax.random.normal(k1, (B, C_in, H, W), jnp.float32)
    style = jax.random.normal(k2, (B, S), jnp.float32)
    params = {
        'conv_weight': jax.random.normal(k3, (C_out, C_in, k, k), jnp.float32),  # randn init
        'mod_weight': jax.random.normal(k4, (C_in, S), jnp.float32),             # EqualLinear weight
        'mod_bias': jnp.ones((C_in,), jnp.float32),                              # bias_init=1
        'act_bias': 0.1 * jax.random.normal(k5, (C_out,), jnp.float32),          # fused-act bias
    }

    # Production-style config: bf16 patches/matmul + fused bias/leaky-relu epilogue.
    out_bf16 = jax.block_until_ready(
        modulated_conv2d_forward(x, style, params,
                                 fused_bias_act=True, compute_dtype=jnp.bfloat16))
    assert out_bf16.shape == (B, C_out, H - k + 1, W - k + 1)
    ref_act = ref_forward(x, style, params, fused_bias_act=True)
    np.testing.assert_allclose(np.asarray(out_bf16), np.asarray(ref_act),
                               rtol=5e-2, atol=5e-2)

    # Exact ModulatedConv2d semantics (no epilogue), f32 compute.
    out_f32 = jax.block_until_ready(
        modulated_conv2d_forward(x, style, params,
                                 fused_bias_act=False, compute_dtype=jnp.float32))
    ref_plain = ref_forward(x, style, params, fused_bias_act=False)
    np.testing.assert_allclose(np.asarray(out_f32), np.asarray(ref_plain),
                               rtol=1e-2, atol=1e-2)

    print("KERNEL_OK")
</pallas_src>

<mosaic_0001>
module attributes {stable_mosaic.version = 11 : i64} {
  func.func @_modconv_kernel(%arg0: i32, %arg1: i32, %arg2: memref<1x1x8xf32, #tpu.memory_space<vmem>>, %arg3: memref<1x200x36xbf16, #tpu.memory_space<vmem>>, %arg4: memref<8x36xf32, #tpu.memory_space<vmem>>, %arg5: memref<1x36xf32, #tpu.memory_space<vmem>>, %arg6: memref<36x128xbf16, #tpu.memory_space<vmem>>, %arg7: memref<36x128xbf16, #tpu.memory_space<vmem>>, %arg8: memref<1x128xf32, #tpu.memory_space<vmem>>, %arg9: memref<1x200x128xf32, #tpu.memory_space<vmem>>) attributes {dimension_semantics = [#tpu.dimension_semantics<parallel>, #tpu.dimension_semantics<parallel>], iteration_bounds = array<i64: 2, 1>, scalar_prefetch = 0 : i64, scratch_operands = 0 : i64, tpu.core_type = #tpu.core_type<tc>, window_params = [{transform_indices = @transform_0, window_bounds = array<i64: 1, 1, 8>}, {transform_indices = @transform_1, window_bounds = array<i64: 1, 200, 36>}, {pipeline_mode = #tpu.pipeline_mode<synchronous>, transform_indices = @transform_2, window_bounds = array<i64: 8, 36>}, {pipeline_mode = #tpu.pipeline_mode<synchronous>, transform_indices = @transform_3, window_bounds = array<i64: 1, 36>}, {pipeline_mode = #tpu.pipeline_mode<synchronous>, transform_indices = @transform_4, window_bounds = array<i64: 36, 128>}, {pipeline_mode = #tpu.pipeline_mode<synchronous>, transform_indices = @transform_5, window_bounds = array<i64: 36, 128>}, {pipeline_mode = #tpu.pipeline_mode<synchronous>, transform_indices = @transform_6, window_bounds = array<i64: 1, 128>}, {transform_indices = @transform_7, window_bounds = array<i64: 1, 200, 128>}]} {
    %c0 = arith.constant 0 : index
    %c0_0 = arith.constant 0 : index
    %c0_1 = arith.constant 0 : index
    %0 = vector.load %arg2[%c0, %c0_0, %c0_1] : memref<1x1x8xf32, #tpu.memory_space<vmem>>, vector<1x1x8xf32>
    %1 = vector.shape_cast %0 : vector<1x1x8xf32> to vector<1x8xf32>
    %c0_2 = arith.constant 0 : index
    %c0_3 = arith.constant 0 : index
    %2 = vector.load %arg4[%c0_2, %c0_3] : memref<8x36xf32, #tpu.memory_space<vmem>>, vector<8x36xf32>
    %cst = arith.constant dense<0.000000e+00> : vector<1x36xf32>
    %3 = tpu.matmul %1, %2, %cst {dimension_numbers = #tpu.dot_dimension_numbers<[1], [0], [0], [1], [0, 0, 1, 1], [], []>} : vector<1x8xf32>, vector<8x36xf32>, vector<1x36xf32> -> vector<1x36xf32>
    %c0_4 = arith.constant 0 : index
    %c0_5 = arith.constant 0 : index
    %4 = vector.load %arg5[%c0_4, %c0_5] : memref<1x36xf32, #tpu.memory_space<vmem>>, vector<1x36xf32>
    %5 = arith.addf %3, %4 : vector<1x36xf32>
    %c0_6 = arith.constant 0 : index
    %c0_7 = arith.constant 0 : index
    %c0_8 = arith.constant 0 : index
    %6 = vector.load %arg3[%c0_6, %c0_7, %c0_8] : memref<1x200x36xbf16, #tpu.memory_space<vmem>>, vector<1x200x36xbf16>
    %7 = vector.shape_cast %6 : vector<1x200x36xbf16> to vector<200x36xbf16>
    %8 = arith.truncf %5 : vector<1x36xf32> to vector<1x36xbf16>
    %9 = vector.broadcast %8 : vector<1x36xbf16> to vector<200x36xbf16>
    %10 = arith.mulf %7, %9 : vector<200x36xbf16>
    %c0_9 = arith.constant 0 : index
    %c0_10 = arith.constant 0 : index
    %11 = vector.load %arg6[%c0_9, %c0_10] : memref<36x128xbf16, #tpu.memory_space<vmem>>, vector<36x128xbf16>
    %cst_11 = arith.constant dense<0.000000e+00> : vector<200x128xf32>
    %12 = tpu.matmul %10, %11, %cst_11 {dimension_numbers = #tpu.dot_dimension_numbers<[1], [0], [0], [1], [0, 0, 1, 1], [], []>} : vector<200x36xbf16>, vector<36x128xbf16>, vector<200x128xf32> -> vector<200x128xf32>
    %13 = arith.mulf %5, %5 : vector<1x36xf32>
    %14 = arith.truncf %13 : vector<1x36xf32> to vector<1x36xbf16>
    %c0_12 = arith.constant 0 : index
    %c0_13 = arith.constant 0 : index
    %15 = vector.load %arg7[%c0_12, %c0_13] : memref<36x128xbf16, #tpu.memory_space<vmem>>, vector<36x128xbf16>
    %cst_14 = arith.constant dense<0.000000e+00> : vector<1x128xf32>
    %16 = tpu.matmul %14, %15, %cst_14 {dimension_numbers = #tpu.dot_dimension_numbers<[1], [0], [0], [1], [0, 0, 1, 1], [], []>} : vector<1x36xbf16>, vector<36x128xbf16>, vector<1x128xf32> -> vector<1x128xf32>
    %cst_15 = arith.constant 9.99999993E-9 : f32
    %17 = vector.broadcast %cst_15 : f32 to vector<1x128xf32>
    %18 = arith.addf %16, %17 : vector<1x128xf32>
    %19 = math.rsqrt %18 : vector<1x128xf32>
    %20 = vector.broadcast %19 : vector<1x128xf32> to vector<200x128xf32>
    %21 = arith.mulf %12, %20 : vector<200x128xf32>
    %c0_16 = arith.constant 0 : index
    %c0_17 = arith.constant 0 : index
    %22 = vector.load %arg8[%c0_16, %c0_17] : memref<1x128xf32, #tpu.memory_space<vmem>>, vector<1x128xf32>
    %23 = vector.broadcast %22 : vector<1x128xf32> to vector<200x128xf32>
    %24 = arith.addf %21, %23 : vector<200x128xf32>
    %cst_18 = arith.constant 0.000000e+00 : f32
    %25 = vector.broadcast %cst_18 : f32 to vector<200x128xf32>
    %26 = arith.cmpf oge, %24, %25 : vector<200x128xf32>
    %cst_19 = arith.constant 2.000000e-01 : f32
    %27 = vector.broadcast %cst_19 : f32 to vector<200x128xf32>
    %28 = arith.mulf %27, %24 : vector<200x128xf32>
    %29 = arith.select %26, %24, %28 : vector<200x128xi1>, vector<200x128xf32>
    %cst_20 = arith.constant 1.41421354 : f32
    %30 = vector.broadcast %cst_20 : f32 to vector<200x128xf32>
    %31 = arith.mulf %29, %30 : vector<200x128xf32>
    %c0_21 = arith.constant 0 : index
    %c0_22 = arith.constant 0 : index
    %c0_23 = arith.constant 0 : index
    %32 = vector.load %arg9[%c0_21, %c0_22, %c0_23] : memref<1x200x128xf32, #tpu.memory_space<vmem>>, vector<1x200x128xf32>
    %33 = vector.shape_cast %32 : vector<1x200x128xf32> to vector<200x128xf32>
    %34 = vector.shape_cast %31 : vector<200x128xf32> to vector<1x200x128xf32>
    tpu.vector_store %arg9[%c0_21, %c0_22, %c0_23], %34 {strides = array<i32>} : memref<1x200x128xf32, #tpu.memory_space<vmem>>, vector<1x200x128xf32>,
    return
  }
  func.func @transform_0(%arg0: i32, %arg1: i32) -> (i32, i32, i32) {
    %c0_i32 = arith.constant 0 : i32
    %c0_i32_0 = arith.constant 0 : i32
    %c0_i32_1 = arith.constant 0 : i32
    return %arg0, %c0_i32, %c0_i32_0 : i32, i32, i32
  }
  func.func @transform_1(%arg0: i32, %arg1: i32) -> (i32, i32, i32) {
    %c0_i32 = arith.constant 0 : i32
    %c0_i32_0 = arith.constant 0 : i32
    return %arg0, %arg1, %c0_i32 : i32, i32, i32
  }
  func.func @transform_2(%arg0: i32, %arg1: i32) -> (i32, i32) {
    %c0_i32 = arith.constant 0 : i32
    %c0_i32_0 = arith.constant 0 : i32
    %c0_i32_1 = arith.constant 0 : i32
    return %c0_i32, %c0_i32_0 : i32, i32
  }
  func.func @transform_3(%arg0: i32, %arg1: i32) -> (i32, i32) {
    %c0_i32 = arith.constant 0 : i32
    %c0_i32_0 = arith.constant 0 : i32
    %c0_i32_1 = arith.constant 0 : i32
    return %c0_i32, %c0_i32_0 : i32, i32
  }
  func.func @transform_4(%arg0: i32, %arg1: i32) -> (i32, i32) {
    %c0_i32 = arith.constant 0 : i32
    %c0_i32_0 = arith.constant 0 : i32
    %c0_i32_1 = arith.constant 0 : i32
    return %c0_i32, %c0_i32_0 : i32, i32
  }
  func.func @transform_5(%arg0: i32, %arg1: i32) -> (i32, i32) {
    %c0_i32 = arith.constant 0 : i32
    %c0_i32_0 = arith.constant 0 : i32
    %c0_i32_1 = arith.constant 0 : i32
    return %c0_i32, %c0_i32_0 : i32, i32
  }
  func.func @transform_6(%arg0: i32, %arg1: i32) -> (i32, i32) {
    %c0_i32 = arith.constant 0 : i32
    %c0_i32_0 = arith.constant 0 : i32
    %c0_i32_1 = arith.constant 0 : i32
    return %c0_i32, %c0_i32_0 : i32, i32
  }
  func.func @transform_7(%arg0: i32, %arg1: i32) -> (i32, i32, i32) {
    %c0_i32 = arith.constant 0 : i32
    %c0_i32_0 = arith.constant 0 : i32
    return %arg0, %arg1, %c0_i32 : i32, i32, i32
  }
}

</mosaic_0001>

<llo_original>
// kernel: tpu_custom_call.1
$region0: #{tpu_custom_call.1}
  #allocation0 [shape = 'u32[]', space=smem, size = 0x4, offset = 0x4, fixed_abs, tag = 'smem constant byte address 0x4 - core index']
  #allocation1 [shape = 'u32[144,128]{1,0:T(1,128)}', space=vmem, size = 0x12000, scoped, tag = 'internal scratch']
  %s0 = inlined_call_operand.hbm [shape: f32[2,1,8], index: 0, kind: input, shape index: {}]
  %s1 = inlined_call_operand.hbm [shape: bf16[2,200,36], index: 1, kind: input, shape index: {}]
  %s2 = inlined_call_operand.hbm [shape: f32[8,36], index: 2, kind: input, shape index: {}]
  %s3 = inlined_call_operand.hbm [shape: f32[1,36], index: 3, kind: input, shape index: {}]
  %s4 = inlined_call_operand.hbm [shape: bf16[36,128], index: 4, kind: input, shape index: {}]
  %s5 = inlined_call_operand.hbm [shape: bf16[36,128], index: 5, kind: input, shape index: {}]
  %s6 = inlined_call_operand.hbm [shape: f32[1,128], index: 6, kind: input, shape index: {}]
  %s7 = inlined_call_operand.hbm [shape: f32[2,200,128], index: 7, kind: output, shape index: {}]
  %s8 = sld [smem:[#allocation0]]
  $region89: #{tpu_custom_call.1} parent=0
    _
  %s10 = ssub.s32 1, %s8
  %s11 = scalar_select 0, %s10, %s8
  $region1: #{tpu_custom_call.1} parent=0
    #allocation2 [shape = 'u8[1024]{0}', space=vmem, size = 0x400, scoped, tag = 'input window, operand 0']
    #allocation3 [shape = 's32[2]{0}', space=sflag, size = 0x8, scoped, tag = 'scoped memory for tpu_custom_call.1']
    #allocation4 [shape = 's32[2]{0}', space=sflag, size = 0x8, scoped, tag = 'scoped memory for tpu_custom_call.1']
    #allocation5 [shape = 'u8[102400]{0}', space=vmem, size = 0x19000, scoped, tag = 'input window, operand 1']
    #allocation6 [shape = 's32[2]{0}', space=sflag, size = 0x8, scoped, tag = 'scoped memory for tpu_custom_call.1']
    #allocation7 [shape = 'u8[4096]{0}', space=vmem, size = 0x1000, scoped, tag = 'input window, operand 2, single buffered']
    #allocation8 [shape = 'u8[512]{0}', space=vmem, size = 0x400, scoped, tag = 'input window, operand 3, single buffered']
    #allocation9 [shape = 's32[1]{0}', space=sflag, size = 0x4, scoped, tag = 'scoped memory for tpu_custom_call.1']
    #allocation10 [shape = 'u8[10240]{0}', space=vmem, size = 0x2800, scoped, tag = 'input window, operand 4, single buffered']
    #allocation11 [shape = 'u8[10240]{0}', space=vmem, size = 0x2800, scoped, tag = 'input window, operand 5, single buffered']
    #allocation12 [shape = 's32[1]{0}', space=sflag, size = 0x4, scoped, tag = 'scoped memory for tpu_custom_call.1']
    #allocation13 [shape = 'u8[512]{0}', space=vmem, size = 0x400, scoped, tag = 'input window, operand 6, single buffered']
    #allocation14 [shape = 'u8[204800]{0}', space=vmem, size = 0x32000, scoped, tag = 'output window, operand 0']
    %12 = vsyncpa [#allocation3], 0
    %s13 = scalar_lea.sflag [#allocation3], 1
    %14 = vsyncpa %s13, 0
    %15 = vsyncpa [#allocation6], 0
    %s16 = scalar_lea.sflag [#allocation6], 1
    %17 = vsyncpa %s16, 0
    %18 = vsyncpa [#allocation9], 0
    %19 = vsyncpa [#allocation12], 0
    %20 = vsyncpa [#allocation4], 0
    %s21 = scalar_lea.sflag [#allocation4], 1
    %22 = vsyncpa %s21, 0
    loop: start=0, step=1, limit=4
    $region2: #{tpu_custom_call.1} parent=1 // loop_pre_header
      _
    $region3: #{tpu_custom_call.1} parent=1 // loop_header
      %s24 = sphi 0, %s28
      %p25 = scmp.ge.s32.totalorder %s24, 4
      %s31 = sphi 0, %s43
      %s32 = sphi 0, %s39
      %s33 = sphi 0, %s31
      %s34 = sphi 0, %s32
      %s35 = sphi 0, %s33
      %s36 = sphi 0, %s34
      %s46 = sphi 0, %s48
      %s49 = sphi 0, %s46
      %s50 = sphi 0, %s49
      %s66 = sphi 0, %s50
      %s74 = sphi 0, %s76
      %s77 = sphi 0, %s74
      %s78 = sphi 0, %s77
      %s94 = sphi 0, %s78
      %s98 = sphi 0, %s98
      %s100 = sphi 0, %s98
      %s101 = sphi 0, %s100
      %s115 = sphi 0, %s101
      %s119 = sphi 0, %s119
      %s121 = sphi 0, %s119
      %s122 = sphi 0, %s121
      %s136 = sphi 0, %s122
      %s140 = sphi 0, %s140
      %s142 = sphi 0, %s140
      %s143 = sphi 0, %s142
      %s157 = sphi 0, %s143
      %s161 = sphi 0, %s161
      %s163 = sphi 0, %s161
      %s164 = sphi 0, %s163
      %s178 = sphi 0, %s164
      %s182 = sphi 0, %s182
      %s184 = sphi 0, %s182
      %s185 = sphi 0, %s184
      %s199 = sphi 0, %s185
      %s207 = sphi 0, %s209
      %s210 = sphi 0, %s207
      %s211 = sphi 0, %s210
      %s227 = sphi 0, %s211
    $region4: #{tpu_custom_call.1} parent=1 // loop_header_branch
      %27 = sbr.rel (%p25) target = $region8
    $region5: #{tpu_custom_call.1} parent=1 // loop_body
      %s29 = ssub.s32 %s24, 1
      %s30 = ssub.s32 %s24, 2
      %s37 = sadd.s32 1, %s32
      %p38 = scmp.ge.s32.totalorder %s37, 1
      %s39 = scalar_select %p38, 0, %s37
      %s40 = sadd.s32 1, %s31
      %s41 = scalar_select %p38, %s40, %s31
      %p42 = scmp.ge.s32.totalorder %s41, 2
      %s43 = scalar_select %p42, 0, %s41
      %s44 = ssub.s32 %s31, %s43
      %p45 = scmp.eq.s32.totalorder %s44, 0
      %s47 = sadd.s32 %s46, 1
      %s48 = scalar_select %p45, %s46, %s47
      %p51 = pneg %p45
      %p52 = scmp.eq.s32.totalorder %s24, 1
      %p53 = por %p51, %p52
      %p54 = scmp.ne.s32.totalorder %s46, %s49
      %p55 = scmp.eq.s32.totalorder %s24, 0
      %p56 = por %p54, %p55
      %p57 = scmp.ne.s32.totalorder %s46, %s49
      %p58 = scmp.eq.s32.totalorder %s29, 1
      %p59 = por %p57, %p58
      %p60 = scmp.ne.s32.totalorder %s49, %s50
      %p61 = scmp.eq.s32.totalorder %s29, 0
      %p62 = por %p60, %p61
      %p63 = scmp.ne.s32.totalorder %s49, %s50
      %p64 = scmp.eq.s32.totalorder %s30, 1
      %p65 = por %p63, %p64
      %p67 = scmp.ne.s32.totalorder %s50, %s66
      %p68 = scmp.eq.s32.totalorder %s30, 0
      %p69 = por %p67, %p68
      %s70 = ssub.s32 %s31, %s43
      %s71 = ssub.s32 %s32, %s39
      %s72 = sor.u32 %s70, %s71
      %p73 = scmp.eq.s32.totalorder %s72, 0
      %s75 = sadd.s32 %s74, 1
      %s76 = scalar_select %p73, %s74, %s75
      %p79 = pneg %p73
      %p80 = scmp.eq.s32.totalorder %s24, 1
      %p81 = por %p79, %p80
      %p82 = scmp.ne.s32.totalorder %s74, %s77
      %p83 = scmp.eq.s32.totalorder %s24, 0
      %p84 = por %p82, %p83
      %p85 = scmp.ne.s32.totalorder %s74, %s77
      %p86 = scmp.eq.s32.totalorder %s29, 1
      %p87 = por %p85, %p86
      %p88 = scmp.ne.s32.totalorder %s77, %s78
      %p89 = scmp.eq.s32.totalorder %s29, 0
      %p90 = por %p88, %p89
      %p91 = scmp.ne.s32.totalorder %s77, %s78
      %p92 = scmp.eq.s32.totalorder %s30, 1
      %p93 = por %p91, %p92
      %p95 = scmp.ne.s32.totalorder %s78, %s94
      %p96 = scmp.eq.s32.totalorder %s30, 0
      %p97 = por %p95, %p96
      %s99 = sadd.s32 %s98, 1
      %p102 = scmp.eq.s32.totalorder %s24, 1
      %p103 = scmp.ne.s32.totalorder %s98, %s100
      %p104 = scmp.eq.s32.totalorder %s24, 0
      %p105 = por %p103, %p104
      %p106 = scmp.ne.s32.totalorder %s98, %s100
      %p107 = scmp.eq.s32.totalorder %s29, 1
      %p108 = por %p106, %p107
      %p109 = scmp.ne.s32.totalorder %s100, %s101
      %p110 = scmp.eq.s32.totalorder %s29, 0
      %p111 = por %p109, %p110
      %p112 = scmp.ne.s32.totalorder %s100, %s101
      %p113 = scmp.eq.s32.totalorder %s30, 1
      %p114 = por %p112, %p113
      %p116 = scmp.ne.s32.totalorder %s101, %s115
      %p117 = scmp.eq.s32.totalorder %s30, 0
      %p118 = por %p116, %p117
      %s120 = sadd.s32 %s119, 1
      %p123 = scmp.eq.s32.totalorder %s24, 1
      %p124 = scmp.ne.s32.totalorder %s119, %s121
      %p125 = scmp.eq.s32.totalorder %s24, 0
      %p126 = por %p124, %p125
      %p127 = scmp.ne.s32.totalorder %s119, %s121
      %p128 = scmp.eq.s32.totalorder %s29, 1
      %p129 = por %p127, %p128
      %p130 = scmp.ne.s32.totalorder %s121, %s122
      %p131 = scmp.eq.s32.totalorder %s29, 0
      %p132 = por %p130, %p131
      %p133 = scmp.ne.s32.totalorder %s121, %s122
      %p134 = scmp.eq.s32.totalorder %s30, 1
      %p135 = por %p133, %p134
      %p137 = scmp.ne.s32.totalorder %s122, %s136
      %p138 = scmp.eq.s32.totalorder %s30, 0
      %p139 = por %p137, %p138
      %s141 = sadd.s32 %s140, 1
      %p144 = scmp.eq.s32.totalorder %s24, 1
      %p145 = scmp.ne.s32.totalorder %s140, %s142
      %p146 = scmp.eq.s32.totalorder %s24, 0
      %p147 = por %p145, %p146
      %p148 = scmp.ne.s32.totalorder %s140, %s142
      %p149 = scmp.eq.s32.totalorder %s29, 1
      %p150 = por %p148, %p149
      %p151 = scmp.ne.s32.totalorder %s142, %s143
      %p152 = scmp.eq.s32.totalorder %s29, 0
      %p153 = por %p151, %p152
      %p154 = scmp.ne.s32.totalorder %s142, %s143
      %p155 = scmp.eq.s32.totalorder %s30, 1
      %p156 = por %p154, %p155
      %p158 = scmp.ne.s32.totalorder %s143, %s157
      %p159 = scmp.eq.s32.totalorder %s30, 0
      %p160 = por %p158, %p159
      %s162 = sadd.s32 %s161, 1
      %p165 = scmp.eq.s32.totalorder %s24, 1
      %p166 = scmp.ne.s32.totalorder %s161, %s163
      %p167 = scmp.eq.s32.totalorder %s24, 0
      %p168 = por %p166, %p167
      %p169 = scmp.ne.s32.totalorder %s161, %s163
      %p170 = scmp.eq.s32.totalorder %s29, 1
      %p171 = por %p169, %p170
      %p172 = scmp.ne.s32.totalorder %s163, %s164
      %p173 = scmp.eq.s32.totalorder %s29, 0
      %p174 = por %p172, %p173
      %p175 = scmp.ne.s32.totalorder %s163, %s164
      %p176 = scmp.eq.s32.totalorder %s30, 1
      %p177 = por %p175, %p176
      %p179 = scmp.ne.s32.totalorder %s164, %s178
      %p180 = scmp.eq.s32.totalorder %s30, 0
      %p181 = por %p179, %p180
      %s183 = sadd.s32 %s182, 1
      %p186 = scmp.eq.s32.totalorder %s24, 1
      %p187 = scmp.ne.s32.totalorder %s182, %s184
      %p188 = scmp.eq.s32.totalorder %s24, 0
      %p189 = por %p187, %p188
      %p190 = scmp.ne.s32.totalorder %s182, %s184
      %p191 = scmp.eq.s32.totalorder %s29, 1
      %p192 = por %p190, %p191
      %p193 = scmp.ne.s32.totalorder %s184, %s185
      %p194 = scmp.eq.s32.totalorder %s29, 0
      %p195 = por %p193, %p194
      %p196 = scmp.ne.s32.totalorder %s184, %s185
      %p197 = scmp.eq.s32.totalorder %s30, 1
      %p198 = por %p196, %p197
      %p200 = scmp.ne.s32.totalorder %s185, %s199
      %p201 = scmp.eq.s32.totalorder %s30, 0
      %p202 = por %p200, %p201
      %s203 = ssub.s32 %s31, %s43
      %s204 = ssub.s32 %s32, %s39
      %s205 = sor.u32 %s203, %s204
      %p206 = scmp.eq.s32.totalorder %s205, 0
      %s208 = sadd.s32 %s207, 1
      %s209 = scalar_select %p206, %s207, %s208
      %p212 = pneg %p206
      %p213 = scmp.eq.s32.totalorder %s24, 1
      %p214 = por %p212, %p213
      %p215 = scmp.ne.s32.totalorder %s207, %s210
      %p216 = scmp.eq.s32.totalorder %s24, 0
      %p217 = por %p215, %p216
      %p218 = scmp.ne.s32.totalorder %s207, %s210
      %p219 = scmp.eq.s32.totalorder %s29, 1
      %p220 = por %p218, %p219
      %p221 = scmp.ne.s32.totalorder %s210, %s211
      %p222 = scmp.eq.s32.totalorder %s29, 0
      %p223 = por %p221, %p222
      %p224 = scmp.ne.s32.totalorder %s210, %s211
      %p225 = scmp.eq.s32.totalorder %s30, 1
      %p226 = por %p224, %p225
      %p228 = scmp.ne.s32.totalorder %s211, %s227
      %p229 = scmp.eq.s32.totalorder %s30, 0
      %p230 = por %p228, %p229
      %p231 = scmp.le.s32.totalorder 1, %s24
      %p232 = scmp.lt.s32.totalorder %s24, 3
      %p233 = pnand %p231, %p232
      %p234 = pneg %p233
      // Predicated region
      $region9: #{tpu_custom_call.1} parent=5 // pred_check
        _
      $region10: #{tpu_custom_call.1} parent=5 // pred_check_branch
        %236 = sbr.rel (%p233) target = $region12
      $region11: #{tpu_custom_call.1} parent=5 // pred_region
        %s237 = ssub.s32 %s24, 1
        // Predicated region
        $region13: #{tpu_custom_call.1} parent=11 // pred_check
          %p238 = pneg %p111
        $region14: #{tpu_custom_call.1} parent=11 // pred_check_branch
          %240 = sbr.rel (%p238) target = $region16
        $region15: #{tpu_custom_call.1} parent=11 // pred_region
          %s242 = ssub.s32 128, 128
          %243 = vsyncadd [#allocation6], %s242
          %s245 = sshll.u32 [#allocation7], 4
          %s246 = int_to_ptr.vmem [resolvable:$true] %s245
          %248 = dma.hbm_to_vmem [thread:$0]  %s2, 128, %s246, [#allocation6]
        $region16: #{tpu_custom_call.1} parent=11 // pred_fallthru
          _
        // Predicated region
        $region17: #{tpu_custom_call.1} parent=11 // pred_check
          %p249 = pneg %p132
        $region18: #{tpu_custom_call.1} parent=11 // pred_check_branch
          %251 = sbr.rel (%p249) target = $region20
        $region19: #{tpu_custom_call.1} parent=11 // pred_region
          %s253 = ssub.s32 16, 16
          %254 = vsyncadd [#allocation9], %s253
          %s256 = sshll.u32 [#allocation8], 4
          %s257 = int_to_ptr.vmem [resolvable:$true] %s256
          %259 = dma.hbm_to_vmem [thread:$0]  %s3, 16, %s257, [#allocation9]
        $region20: #{tpu_custom_call.1} parent=11 // pred_fallthru
          _
        // Predicated region
        $region21: #{tpu_custom_call.1} parent=11 // pred_check
          %p260 = pneg %p153
        $region22: #{tpu_custom_call.1} parent=11 // pred_check_branch
          %262 = sbr.rel (%p260) target = $region24
        $region23: #{tpu_custom_call.1} parent=11 // pred_region
          %s264 = ssub.s32 320, 320
          %265 = vsyncadd [#allocation9], %s264
          %s266 = sshll.u32 [#allocation10], 4
          %s267 = int_to_ptr.vmem [resolvable:$true] %s266
          %272 = dma.hbm_to_vmem [thread:$0]  %s4, 320, %s267, [#allocation9], 64, 64, 4
        $region24: #{tpu_custom_call.1} parent=11 // pred_fallthru
          _
        // Predicated region
        $region25: #{tpu_custom_call.1} parent=11 // pred_check
          %p273 = pneg %p174
        $region26: #{tpu_custom_call.1} parent=11 // pred_check_branch
          %275 = sbr.rel (%p273) target = $region28
        $region27: #{tpu_custom_call.1} parent=11 // pred_region
          %s277 = ssub.s32 320, 320
          %278 = vsyncadd [#allocation12], %s277
          %s279 = sshll.u32 [#allocation11], 4
          %s280 = int_to_ptr.vmem [resolvable:$true] %s279
          %285 = dma.hbm_to_vmem [thread:$0]  %s5, 320, %s280, [#allocation12], 64, 64, 4
        $region28: #{tpu_custom_call.1} parent=11 // pred_fallthru
          _
        // Predicated region
        $region29: #{tpu_custom_call.1} parent=11 // pred_check
          %p286 = pneg %p195
        $region30: #{tpu_custom_call.1} parent=11 // pred_check_branch
          %288 = sbr.rel (%p286) target = $region32
        $region31: #{tpu_custom_call.1} parent=11 // pred_region
          %s290 = ssub.s32 16, 16
          %291 = vsyncadd [#allocation12], %s290
          %s293 = sshll.u32 [#allocation13], 4
          %s294 = int_to_ptr.vmem [resolvable:$true] %s293
          %296 = dma.hbm_to_vmem [thread:$0]  %s6, 16, %s294, [#allocation12]
        $region32: #{tpu_custom_call.1} parent=11 // pred_fallthru
          _
      $region12: #{tpu_custom_call.1} parent=5 // pred_fallthru
        _
      %p297 = scmp.lt.s32.totalorder %s24, 2
      // Predicated region
      $region33: #{tpu_custom_call.1} parent=5 // pred_check
        %p298 = pneg %p297
      $region34: #{tpu_custom_call.1} parent=5 // pred_check_branch
        %300 = sbr.rel (%p298) target = $region36
      $region35: #{tpu_custom_call.1} parent=5 // pred_region
        // Predicated region
        $region37: #{tpu_custom_call.1} parent=35 // pred_check
          %p301 = pneg %p56
        $region38: #{tpu_custom_call.1} parent=35 // pred_check_branch
          %303 = sbr.rel (%p301) target = $region40
        $region39: #{tpu_custom_call.1} parent=35 // pred_region
          %s304 = sand.u32 %s46, 1
          %s305 = scalar_lea.sflag [#allocation3], %s304
          %s306 = sand.u32 %s46, 1
          %s307 = scalar_lea.vmem [#allocation2], %s306
          %s309 = ssub.s32 16, 16
          %310 = vsyncadd %s305, %s309
          %s311 = smul.addr %s31, 16
          %s312 = scalar_lea.hbm %s0, %s311
          %s314 = sshll.u32 %s307, 4
          %s315 = int_to_ptr.vmem [resolvable:$true] %s314
          %317 = dma.hbm_to_vmem [thread:$0]  %s312, 16, %s315, %s305
        $region40: #{tpu_custom_call.1} parent=35 // pred_fallthru
          _
        // Predicated region
        $region41: #{tpu_custom_call.1} parent=35 // pred_check
          %p318 = pneg %p84
        $region42: #{tpu_custom_call.1} parent=35 // pred_check_branch
          %320 = sbr.rel (%p318) target = $region44
        $region43: #{tpu_custom_call.1} parent=35 // pred_region
          %s321 = sand.u32 %s24, 1
          %s322 = scalar_lea.sflag [#allocation6], %s321
          %s323 = sand.u32 %s74, 1
          %s324 = smul.addr %s323, 100
          %s325 = scalar_lea.vmem [#allocation5], %s324
          %s326 = smul.u32 25, %s32
          %s328 = ssub.s32 1600, 1600
          %329 = vsyncadd %s322, %s328
          %s330 = smul.addr %s31, 25
          %s331 = sadd.s32 %s326, %s330
          %s332 = smul.addr %s331, 64
          %s333 = scalar_lea.hbm %s1, %s332
          %s334 = sshll.u32 %s325, 4
          %s335 = int_to_ptr.vmem [resolvable:$true] %s334
          %340 = dma.hbm_to_vmem [thread:$0]  %s333, 1600, %s335, %s322, 64, 64, 4
        $region44: #{tpu_custom_call.1} parent=35 // pred_fallthru
          _
      $region36: #{tpu_custom_call.1} parent=5 // pred_fallthru
        _
      %p341 = scmp.le.s32.totalorder 1, %s24
      %p342 = scmp.lt.s32.totalorder %s24, 3
      %p343 = pnand %p341, %p342
      %p344 = pneg %p343
      // Predicated region
      $region45: #{tpu_custom_call.1} parent=5 // pred_check
        _
      $region46: #{tpu_custom_call.1} parent=5 // pred_check_branch
        %346 = sbr.rel (%p343) target = $region48
      $region47: #{tpu_custom_call.1} parent=5 // pred_region
        %s347 = ssub.s32 %s24, 1
        %s348 = sand.u32 %s49, 1
        %s349 = scalar_lea.sflag [#allocation3], %s348
        %s350 = sand.u32 %s49, 1
        %s351 = scalar_lea.vmem [#allocation2], %s350
        // Predicated region
        $region49: #{tpu_custom_call.1} parent=47 // pred_check
          %p352 = pneg %p62
        $region50: #{tpu_custom_call.1} parent=47 // pred_check_branch
          %354 = sbr.rel (%p352) target = $region52
        $region51: #{tpu_custom_call.1} parent=47 // pred_region
          %355 = dma.done %s349, 16
        $region52: #{tpu_custom_call.1} parent=47 // pred_fallthru
          _
        %s356 = sand.u32 %s29, 1
        %s357 = scalar_lea.sflag [#allocation6], %s356
        %s358 = sand.u32 %s77, 1
        %s359 = smul.addr %s358, 100
        %s360 = scalar_lea.vmem [#allocation5], %s359
        // Predicated region
        $region53: #{tpu_custom_call.1} parent=47 // pred_check
          %p361 = pneg %p90
        $region54: #{tpu_custom_call.1} parent=47 // pred_check_branch
          %363 = sbr.rel (%p361) target = $region56
        $region55: #{tpu_custom_call.1} parent=47 // pred_region
          %364 = dma.done %s357, 1600
        $region56: #{tpu_custom_call.1} parent=47 // pred_fallthru
          _
        // Predicated region
        $region57: #{tpu_custom_call.1} parent=47 // pred_check
          %p365 = pneg %p111
        $region58: #{tpu_custom_call.1} parent=47 // pred_check_branch
          %367 = sbr.rel (%p365) target = $region60
        $region59: #{tpu_custom_call.1} parent=47 // pred_region
          %368 = dma.done [#allocation6], 128
        $region60: #{tpu_custom_call.1} parent=47 // pred_fallthru
          _
        // Predicated region
        $region61: #{tpu_custom_call.1} parent=47 // pred_check
          %p369 = pneg %p132
        $region62: #{tpu_custom_call.1} parent=47 // pred_check_branch
          %371 = sbr.rel (%p369) target = $region64
        $region63: #{tpu_custom_call.1} parent=47 // pred_region
          %372 = dma.done [#allocation9], 16
        $region64: #{tpu_custom_call.1} parent=47 // pred_fallthru
          _
        // Predicated region
        $region65: #{tpu_custom_call.1} parent=47 // pred_check
          %p373 = pneg %p153
        $region66: #{tpu_custom_call.1} parent=47 // pred_check_branch
          %375 = sbr.rel (%p373) target = $region68
        $region67: #{tpu_custom_call.1} parent=47 // pred_region
          %376 = dma.done [#allocation9], 320
        $region68: #{tpu_custom_call.1} parent=47 // pred_fallthru
          _
        // Predicated region
        $region69: #{tpu_custom_call.1} parent=47 // pred_check
          %p377 = pneg %p174
        $region70: #{tpu_custom_call.1} parent=47 // pred_check_branch
          %379 = sbr.rel (%p377) target = $region72
        $region71: #{tpu_custom_call.1} parent=47 // pred_region
          %380 = dma.done [#allocation12], 320
        $region72: #{tpu_custom_call.1} parent=47 // pred_fallthru
          _
        // Predicated region
        $region73: #{tpu_custom_call.1} parent=47 // pred_check
          %p381 = pneg %p195
        $region74: #{tpu_custom_call.1} parent=47 // pred_check_branch
          %383 = sbr.rel (%p381) target = $region76
        $region75: #{tpu_custom_call.1} parent=47 // pred_region
          %384 = dma.done [#allocation12], 16
        $region76: #{tpu_custom_call.1} parent=47 // pred_fallthru
          _
        %s385 = sand.u32 %s49, 1
        %s386 = scalar_lea.sflag [#allocation3], %s385
        %s387 = sand.u32 %s49, 1
        %s388 = scalar_lea.vmem [#allocation2], %s387
        %p389 = pneg %p62
        %p390 = pneg %p59
        %s391 = sand.u32 %s29, 1
        %s392 = scalar_lea.sflag [#allocation6], %s391
        %s393 = sand.u32 %s77, 1
        %s394 = smul.addr %s393, 100
        %s395 = scalar_lea.vmem [#allocation5], %s394
        %p396 = pneg %p90
        %p397 = pneg %p87
        %p398 = pneg %p111
        %p399 = pneg %p108
        %p400 = pneg %p132
        %p401 = pneg %p129
        %p402 = pneg %p153
        %p403 = pneg %p150
        %p404 = pneg %p174
        %p405 = pneg %p171
        %p406 = pneg %p195
        %p407 = pneg %p192
        %p408 = pneg %p223
        %p409 = pneg %p220
        %s410 = sand.u32 %s210, 1
        %s411 = scalar_lea.sflag [#allocation4], %s410
        %s412 = sand.u32 %s210, 1
        %s413 = smul.addr %s412, 200
        %s414 = scalar_lea.vmem [#allocation14], %s413
        %s415 = smul.u32 25, %s34
        %s416 = smul.u32 25, %s34
        %v418 = vld [vmem:[%s351] sm:$0x1]
        %v419 = vld [vmem:[#allocation7] sm:$0xff]
        %v420 = vld [vmem:[#allocation8] sm:$0x1]
        %vm421 = vcmask 64512
        %v423 = vsel %vm421, %v418, 0
        %425 = vmatprep.subr.mxu0 0.0
        %426 = vmatpush1.msra.mxu0 %v419
        %427 = vmatprep.subr.mxu0 0.0
        %428 = vmatpush1.msra.mxu0 0.0
        %429 = vmatprep.subr.mxu0 0.0
        %430 = vmatpush1.msra.mxu0 0.0
        %431 = vmatprep.subr.mxu0 0.0
        %432 = vmatpush1.msra.mxu0 0.0
        %433 = vmatprep.subr.mxu0 0.0
        %434 = vmatpush1.msra.mxu0 0.0
        %435 = vmatprep.subr.mxu0 0.0
        %436 = vmatpush1.msra.mxu0 0.0
        %437 = vmatprep.subr.mxu0 0.0
        %438 = vmatpush1.msra.mxu0 0.0
        %439 = vmatprep.subr.mxu0 0.0
        %440 = vmatpush1.msra.mxu0 0.0
        %441 = vmatprep.subr.mxu0 0.0
        %442 = vmatpush1.msra.mxu0 0.0
        %443 = vmatprep.subr.mxu0 0.0
        %444 = vmatpush1.msra.mxu0 0.0
        %445 = vmatprep.subr.mxu0 0.0
        %446 = vmatpush1.msra.mxu0 0.0
        %447 = vmatprep.subr.mxu0 0.0
        %448 = vmatpush1.msra.mxu0 0.0
        %449 = vmatprep.subr.mxu0 0.0
        %450 = vmatpush1.msra.mxu0 0.0
        %451 = vmatprep.subr.mxu0 0.0
        %452 = vmatpush1.msra.mxu0 0.0
        %453 = vmatprep.subr.mxu0 0.0
        %454 = vmatpush1.msra.mxu0 0.0
        %455 = vmatprep.subr.mxu0 0.0
        %456 = vmatpush1.msra.mxu0 0.0
        %457 = vmatprep.subr.mxu0 0.0
        %458 = vmatpush1.msra.mxu0 0.0
        %459 = vmatprep.subr.mxu0 0.0
        %460 = vmatpush1.msra.mxu0 0.0
        %461 = vmatprep.subr.mxu0 0.0
        %462 = vmatpush1.msra.mxu0 0.0
        %463 = vmatprep.subr.mxu0 0.0
        %464 = vmatpush1.msra.mxu0 0.0
        %465 = vmatprep.subr.mxu0 0.0
        %466 = vmatpush1.msra.mxu0 0.0
        %467 = vmatprep.subr.mxu0 0.0
        %468 = vmatpush1.msra.mxu0 0.0
        %469 = vmatprep.subr.mxu0 0.0
        %470 = vmatpush1.msra.mxu0 0.0
        %471 = vmatprep.subr.mxu0 0.0
        %472 = vmatpush1.msra.mxu0 0.0
        %473 = vmatprep.subr.mxu0 0.0
        %474 = vmatpush1.msra.mxu0 0.0
        %475 = vmatprep.subr.mxu0 0.0
        %476 = vmatpush1.msra.mxu0 0.0
        %477 = vmatprep.subr.mxu0 0.0
        %478 = vmatpush1.msra.mxu0 0.0
        %479 = vmatprep.subr.mxu0 0.0
        %480 = vmatpush1.msra.mxu0 0.0
        %481 = vmatprep.subr.mxu0 0.0
        %482 = vmatpush1.msra.mxu0 0.0
        %483 = vmatprep.subr.mxu0 0.0
        %484 = vmatpush1.msra.mxu0 0.0
        %485 = vmatprep.subr.mxu0 0.0
        %486 = vmatpush1.msra.mxu0 0.0
        %487 = vmatprep.subr.mxu0 0.0
        %488 = vmatpush1.msra.mxu0 0.0
        %489 = vmatprep.mubr.f32.mxu0 0.0
        %490 = vmatmul.mubr.f32.gmra.mrb[0].mxu0 %v423
        %v491 = vpop.f32.mrb[0].mxu0
        %v492 = vadd.f32 %v420, %v491
        %v493 = vpop.f32.mrb[0].mxu0
        %494 = vdwg.mxu0
        %v495 = vld [vmem:[%s360] sm:$0xf]
        %v496 = vld [vmem:[%s360 + $0x4] sm:$0xf]
        %v497 = vld [vmem:[%s360 + $0x8] sm:$0xf]
        %v498 = vld [vmem:[%s360 + $0xc] sm:$0xf]
        %v499 = vld [vmem:[%s360 + $0x10] sm:$0xf]
        %v500 = vld [vmem:[%s360 + $0x14] sm:$0xf]
        %v501 = vld [vmem:[%s360 + $0x18] sm:$0xf]
        %v502 = vld [vmem:[%s360 + $0x1c] sm:$0xf]
        %v503 = vld [vmem:[%s360 + $0x20] sm:$0xf]
        %v504 = vld [vmem:[%s360 + $0x24] sm:$0xf]
        %v505 = vld [vmem:[%s360 + $0x28] sm:$0xf]
        %v506 = vld [vmem:[%s360 + $0x2c] sm:$0xf]
        %v507 = vld [vmem:[%s360 + $0x30] sm:$0xf]
        %v508 = vld [vmem:[%s360 + $0x34] sm:$0xf]
        %v509 = vld [vmem:[%s360 + $0x38] sm:$0xf]
        %v510 = vld [vmem:[%s360 + $0x3c] sm:$0xf]
        %v511 = vld [vmem:[%s360 + $0x40] sm:$0xf]
        %v512 = vld [vmem:[%s360 + $0x44] sm:$0xf]
        %v513 = vld [vmem:[%s360 + $0x48] sm:$0xf]
        %v514 = vld [vmem:[%s360 + $0x4c] sm:$0xf]
        %v515 = vld [vmem:[%s360 + $0x50] sm:$0xf]
        %v516 = vld [vmem:[%s360 + $0x54] sm:$0xf]
        %v517 = vld [vmem:[%s360 + $0x58] sm:$0xf]
        %v518 = vld [vmem:[%s360 + $0x5c] sm:$0xf]
        %v519 = vld [vmem:[%s360 + $0x60] sm:$0xf]
        %v520 = vpack.c.bf16 %v492, %v492
        %v522 = vpack.i.b16 %v520, %v520
        %v524 = vlaneseq
        %v525 = vshrl.u32 %v524, 7
        %v526 = vsub.s32 0, %v525
        %v527 = vrot.slane %v522, %v526
        %v529 = vunpack.c.l.b16 %v527
        %v530 = vpack.c.b16 %v529, %v529
        %v532 = vmul.bf16 %v495, %v530
        %v533 = vmul.bf16 %v496, %v530
        %v534 = vmul.bf16 %v497, %v530
        %v535 = vmul.bf16 %v498, %v530
        %v536 = vmul.bf16 %v499, %v530
        %v537 = vmul.bf16 %v500, %v530
        %v538 = vmul.bf16 %v501, %v530
        %v539 = vmul.bf16 %v502, %v530
        %v540 = vmul.bf16 %v503, %v530
        %v541 = vmul.bf16 %v504, %v530
        %v542 = vmul.bf16 %v505, %v530
        %v543 = vmul.bf16 %v506, %v530
        %v544 = vmul.bf16 %v507, %v530
        %v545 = vmul.bf16 %v508, %v530
        %v546 = vmul.bf16 %v509, %v530
        %v547 = vmul.bf16 %v510, %v530
        %v548 = vmul.bf16 %v511, %v530
        %v549 = vmul.bf16 %v512, %v530
        %v550 = vmul.bf16 %v513, %v530
        %v551 = vmul.bf16 %v514, %v530
        %v552 = vmul.bf16 %v515, %v530
        %v553 = vmul.bf16 %v516, %v530
        %v554 = vmul.bf16 %v517, %v530
        %v555 = vmul.bf16 %v518, %v530
        %v556 = vmul.bf16 %v519, %v530
        %v557 = vld [vmem:[#allocation10] sm:$0xf]
        %v558 = vld [vmem:[#allocation10 + $0x4] sm:$0xf]
        %v559 = vld [vmem:[#allocation10 + $0x8] sm:$0xf]
        %v560 = vld [vmem:[#allocation10 + $0xc] sm:$0xf]
        %v561 = vld [vmem:[#allocation10 + $0x10] sm:$0x3]
        %v587 = vunpack.c.l.b16 %v532
        %v588 = vunpack.c.l.b16 %v533
        %v589 = vunpack.c.l.b16 %v534
        %v590 = vunpack.c.l.b16 %v535
        %v591 = vunpack.c.l.b16 %v536
        %v592 = vunpack.c.l.b16 %v537
        %v593 = vunpack.c.l.b16 %v538
        %v594 = vunpack.c.l.b16 %v539
        %v595 = vunpack.c.l.b16 %v540
        %v596 = vunpack.c.l.b16 %v541
        %v597 = vunpack.c.l.b16 %v542
        %v598 = vunpack.c.l.b16 %v543
        %v599 = vunpack.c.l.b16 %v544
        %v600 = vunpack.c.l.b16 %v545
        %v601 = vunpack.c.l.b16 %v546
        %v602 = vunpack.c.l.b16 %v547
        %v603 = vunpack.c.l.b16 %v548
        %v604 = vunpack.c.l.b16 %v549
        %v605 = vunpack.c.l.b16 %v550
        %v606 = vunpack.c.l.b16 %v551
        %v607 = vunpack.c.l.b16 %v552
        %v608 = vunpack.c.l.b16 %v553
        %v609 = vunpack.c.l.b16 %v554
        %v610 = vunpack.c.l.b16 %v555
        %v611 = vunpack.c.l.b16 %v556
        %v612 = vpack.c.b16 %v588, %v587
        %v613 = vpack.c.b16 %v590, %v589
        %v614 = vpack.c.b16 %v592, %v591
        %v615 = vpack.c.b16 %v594, %v593
        %v616 = vpack.c.b16 %v596, %v595
        %v617 = vpack.c.b16 %v598, %v597
        %v618 = vpack.c.b16 %v600, %v599
        %v619 = vpack.c.b16 %v602, %v601
        %v620 = vpack.c.b16 %v604, %v603
        %v621 = vpack.c.b16 %v606, %v605
        %v622 = vpack.c.b16 %v608, %v607
        %v623 = vpack.c.b16 %v610, %v609
        %v624 = vpack.c.b16 %v611, %v611
        %v630 = vunpack.c.l.b16 %v557
        %v631 = vunpack.c.l.b16 %v558
        %v632 = vunpack.c.l.b16 %v559
        %v633 = vunpack.c.l.b16 %v560
        %v634 = vunpack.c.l.b16 %v561
        %v635 = vpack.c.b16 %v631, %v630
        %v636 = vpack.c.b16 %v633, %v632
        %v637 = vpack.c.b16 %v634, %v634
        %vm640 = vcmask 293888
        %v642 = vsel %vm640, %v612, 0
        %v645 = vsel %vm640, %v613, 0
        %v648 = vsel %vm640, %v614, 0
        %v651 = vsel %vm640, %v615, 0
        %v654 = vsel %vm640, %v616, 0
        %v657 = vsel %vm640, %v617, 0
        %v660 = vsel %vm640, %v618, 0
        %v663 = vsel %vm640, %v619, 0
        %v666 = vsel %vm640, %v620, 0
        %v669 = vsel %vm640, %v621, 0
        %v672 = vsel %vm640, %v622, 0
        %v675 = vsel %vm640, %v623, 0
        %v678 = vsel %vm640, %v624, 0
        %vm680 = vcmask 1041408
        %v682 = vsel %vm680, %v637, 0
        %684 = vmatprep.subr.bf16.mxu0 0
        %685 = vmatpush1.bf16.msra.mxu0 %v635
        %686 = vmatprep.subr.bf16.mxu0 0
        %687 = vmatpush1.bf16.msra.mxu0 %v636
        %688 = vmatprep.subr.bf16.mxu0 0
        %689 = vmatpush1.bf16.msra.mxu0 %v682
        %690 = vmatprep.subr.bf16.mxu0 0
        %691 = vmatpush1.bf16.msra.mxu0 0
        %692 = vmatprep.subr.bf16.mxu0 0
        %693 = vmatpush1.bf16.msra.mxu0 0
        %694 = vmatprep.subr.bf16.mxu0 0
        %695 = vmatpush1.bf16.msra.mxu0 0
        %696 = vmatprep.subr.bf16.mxu0 0
        %697 = vmatpush1.bf16.msra.mxu0 0
        %698 = vmatprep.subr.bf16.mxu0 0
        %699 = vmatpush1.bf16.msra.mxu0 0
        %700 = vmatprep.subr.bf16.mxu0 0
        %701 = vmatpush1.bf16.msra.mxu0 0
        %702 = vmatprep.subr.bf16.mxu0 0
        %703 = vmatpush1.bf16.msra.mxu0 0
        %704 = vmatprep.subr.bf16.mxu0 0
        %705 = vmatpush1.bf16.msra.mxu0 0
        %706 = vmatprep.subr.bf16.mxu0 0
        %707 = vmatpush1.bf16.msra.mxu0 0
        %708 = vmatprep.subr.bf16.mxu0 0
        %709 = vmatpush1.bf16.msra.mxu0 0
        %710 = vmatprep.subr.bf16.mxu0 0
        %711 = vmatpush1.bf16.msra.mxu0 0
        %712 = vmatprep.subr.bf16.mxu0 0
        %713 = vmatpush1.bf16.msra.mxu0 0
        %714 = vmatprep.subr.bf16.mxu0 0
        %715 = vmatpush1.bf16.msra.mxu0 0
        %716 = vmatprep.mubr.bf16.mxu0 0
        %717 = vmatmul.mubr.bf16.gmra.mrb[0].mxu0 %v642
        %v718 = vpop.f32.mrb[0].mxu0
        %v719 = vadd.f32 0.0, %v718
        %v720 = vpop.f32.mrb[0].mxu0
        %v721 = vpop.f32.mrb[0].mxu0
        %v722 = vadd.f32 0.0, %v721
        %v723 = vpop.f32.mrb[0].mxu0
        %724 = vmatprep.mubr.bf16.mxu0 0
        %725 = vmatmul.mubr.bf16.gmra.mrb[0].mxu0 %v645
        %v726 = vpop.f32.mrb[0].mxu0
        %v727 = vadd.f32 0.0, %v726
        %v728 = vpop.f32.mrb[0].mxu0
        %v729 = vpop.f32.mrb[0].mxu0
        %v730 = vadd.f32 0.0, %v729
        %v731 = vpop.f32.mrb[0].mxu0
        %732 = vmatprep.mubr.bf16.mxu0 0
        %733 = vmatmul.mubr.bf16.gmra.mrb[0].mxu0 %v648
        %v734 = vpop.f32.mrb[0].mxu0
        %v735 = vadd.f32 0.0, %v734
        %v736 = vpop.f32.mrb[0].mxu0
        %v737 = vpop.f32.mrb[0].mxu0
        %v738 = vadd.f32 0.0, %v737
        %v739 = vpop.f32.mrb[0].mxu0
        %740 = vmatprep.mubr.bf16.mxu0 0
        %741 = vmatmul.mubr.bf16.gmra.mrb[0].mxu0 %v651
        %v742 = vpop.f32.mrb[0].mxu0
        %v743 = vadd.f32 0.0, %v742
        %v744 = vpop.f32.mrb[0].mxu0
        %v745 = vpop.f32.mrb[0].mxu0
        %v746 = vadd.f32 0.0, %v745
        %v747 = vpop.f32.mrb[0].mxu0
        %748 = vmatprep.mubr.bf16.mxu0 0
        %749 = vmatmul.mubr.bf16.gmra.mrb[0].mxu0 %v654
        %v750 = vpop.f32.mrb[0].mxu0
        %v751 = vadd.f32 0.0, %v750
        %v752 = vpop.f32.mrb[0].mxu0
        %v753 = vpop.f32.mrb[0].mxu0
        %v754 = vadd.f32 0.0, %v753
        %v755 = vpop.f32.mrb[0].mxu0
        %756 = vmatprep.mubr.bf16.mxu0 0
        %757 = vmatmul.mubr.bf16.gmra.mrb[0].mxu0 %v657
        %v758 = vpop.f32.mrb[0].mxu0
        %v759 = vadd.f32 0.0, %v758
        %v760 = vpop.f32.mrb[0].mxu0
        %v761 = vpop.f32.mrb[0].mxu0
        %v762 = vadd.f32 0.0, %v761
        %v763 = vpop.f32.mrb[0].mxu0
        %764 = vmatprep.mubr.bf16.mxu0 0
        %765 = vmatmul.mubr.bf16.gmra.mrb[0].mxu0 %v660
        %v766 = vpop.f32.mrb[0].mxu0
        %v767 = vadd.f32 0.0, %v766
        %v768 = vpop.f32.mrb[0].mxu0
        %v769 = vpop.f32.mrb[0].mxu0
        %v770 = vadd.f32 0.0, %v769
        %v771 = vpop.f32.mrb[0].mxu0
        %772 = vmatprep.mubr.bf16.mxu0 0
        %773 = vmatmul.mubr.bf16.gmra.mrb[0].mxu0 %v663
        %v774 = vpop.f32.mrb[0].mxu0
        %v775 = vadd.f32 0.0, %v774
        %v776 = vpop.f32.mrb[0].mxu0
        %v777 = vpop.f32.mrb[0].mxu0
        %v778 = vadd.f32 0.0, %v777
        %v779 = vpop.f32.mrb[0].mxu0
        %780 = vmatprep.mubr.bf16.mxu0 0
        %781 = vmatmul.mubr.bf16.gmra.mrb[0].mxu0 %v666
        %v782 = vpop.f32.mrb[0].mxu0
        %v783 = vadd.f32 0.0, %v782
        %v784 = vpop.f32.mrb[0].mxu0
        %v785 = vpop.f32.mrb[0].mxu0
        %v786 = vadd.f32 0.0, %v785
        %v787 = vpop.f32.mrb[0].mxu0
        %788 = vmatprep.mubr.bf16.mxu0 0
        %789 = vmatmul.mubr.bf16.gmra.mrb[0].mxu0 %v669
        %v790 = vpop.f32.mrb[0].mxu0
        %v791 = vadd.f32 0.0, %v790
        %v792 = vpop.f32.mrb[0].mxu0
        %v793 = vpop.f32.mrb[0].mxu0
        %v794 = vadd.f32 0.0, %v793
        %v795 = vpop.f32.mrb[0].mxu0
        %796 = vmatprep.mubr.bf16.mxu0 0
        %797 = vmatmul.mubr.bf16.gmra.mrb[0].mxu0 %v672
        %v798 = vpop.f32.mrb[0].mxu0
        %v799 = vadd.f32 0.0, %v798
        %v800 = vpop.f32.mrb[0].mxu0
        %v801 = vpop.f32.mrb[0].mxu0
        %v802 = vadd.f32 0.0, %v801
        %v803 = vpop.f32.mrb[0].mxu0
        %804 = vmatprep.mubr.bf16.mxu0 0
        %805 = vmatmul.mubr.bf16.gmra.mrb[0].mxu0 %v675
        %v806 = vpop.f32.mrb[0].mxu0
        %v807 = vadd.f32 0.0, %v806
        %v808 = vpop.f32.mrb[0].mxu0
        %v809 = vpop.f32.mrb[0].mxu0
        %v810 = vadd.f32 0.0, %v809
        %v811 = vpop.f32.mrb[0].mxu0
        %812 = vmatprep.mubr.bf16.mxu0 0
        %813 = vmatmul.mubr.bf16.gmra.mrb[0].mxu0 %v678
        %v814 = vpop.f32.mrb[0].mxu0
        %v815 = vadd.f32 0.0, %v814
        %v816 = vpop.f32.mrb[0].mxu0
        %v817 = vpop.f32.mrb[0].mxu0
        %v818 = vpop.f32.mrb[0].mxu0
        %819 = vdwg.mxu0
        %v820 = vmul.f32 %v492, %v492
        %v821 = vpack.c.bf16 %v820, %v820
        %v822 = vld [vmem:[#allocation11] sm:$0xf]
        %v823 = vld [vmem:[#allocation11 + $0x4] sm:$0xf]
        %v824 = vld [vmem:[#allocation11 + $0x8] sm:$0xf]
        %v825 = vld [vmem:[#allocation11 + $0xc] sm:$0xf]
        %v826 = vld [vmem:[#allocation11 + $0x10] sm:$0x3]
        %v832 = vunpack.c.l.b16 %v822
        %v833 = vunpack.c.l.b16 %v823
        %v834 = vunpack.c.l.b16 %v824
        %v835 = vunpack.c.l.b16 %v825
        %v836 = vunpack.c.l.b16 %v826
        %v837 = vpack.c.b16 %v833, %v832
        %v838 = vpack.c.b16 %v835, %v834
        %v839 = vpack.c.b16 %v836, %v836
        %v843 = vsel %vm640, %v821, 0
        %v846 = vsel %vm680, %v839, 0
        %848 = vmatprep.subr.bf16.mxu0 0
        %849 = vmatpush1.bf16.msra.mxu0 %v837
        %850 = vmatprep.subr.bf16.mxu0 0
        %851 = vmatpush1.bf16.msra.mxu0 %v838
        %852 = vmatprep.subr.bf16.mxu0 0
        %853 = vmatpush1.bf16.msra.mxu0 %v846
        %854 = vmatprep.subr.bf16.mxu0 0
        %855 = vmatpush1.bf16.msra.mxu0 0
        %856 = vmatprep.subr.bf16.mxu0 0
        %857 = vmatpush1.bf16.msra.mxu0 0
        %858 = vmatprep.subr.bf16.mxu0 0
        %859 = vmatpush1.bf16.msra.mxu0 0
        %860 = vmatprep.subr.bf16.mxu0 0
        %861 = vmatpush1.bf16.msra.mxu0 0
        %862 = vmatprep.subr.bf16.mxu0 0
        %863 = vmatpush1.bf16.msra.mxu0 0
        %864 = vmatprep.subr.bf16.mxu0 0
        %865 = vmatpush1.bf16.msra.mxu0 0
        %866 = vmatprep.subr.bf16.mxu0 0
        %867 = vmatpush1.bf16.msra.mxu0 0
        %868 = vmatprep.subr.bf16.mxu0 0
        %869 = vmatpush1.bf16.msra.mxu0 0
        %870 = vmatprep.subr.bf16.mxu0 0
        %871 = vmatpush1.bf16.msra.mxu0 0
        %872 = vmatprep.subr.bf16.mxu0 0
        %873 = vmatpush1.bf16.msra.mxu0 0
        %874 = vmatprep.subr.bf16.mxu0 0
        %875 = vmatpush1.bf16.msra.mxu0 0
        %876 = vmatprep.subr.bf16.mxu0 0
        %877 = vmatpush1.bf16.msra.mxu0 0
        %878 = vmatprep.subr.bf16.mxu0 0
        %879 = vmatpush1.bf16.msra.mxu0 0
        %880 = vmatprep.mubr.bf16.mxu0 0
        %881 = vmatmul.mubr.bf16.gmra.mrb[0].mxu0 %v843
        %v882 = vpop.f32.mrb[0].mxu0
        %v883 = vadd.f32 1e-08, %v882
        %v884 = vpop.f32.mrb[0].mxu0
        %v885 = vpop.f32.mrb[0].mxu0
        %v886 = vpop.f32.mrb[0].mxu0
        %887 = vdwg.mxu0
        %v888 = vrsqrt.pop %v883
        %v889 = vlaneseq
        %v890 = vshrl.u32 %v889, 7
        %v891 = vsub.s32 0, %v890
        %v892 = vrot.slane %v888, %v891
        %v893 = vmul.f32 %v719, %v892
        %v894 = vmul.f32 %v722, %v892
        %v895 = vmul.f32 %v727, %v892
        %v896 = vmul.f32 %v730, %v892
        %v897 = vmul.f32 %v735, %v892
        %v898 = vmul.f32 %v738, %v892
        %v899 = vmul.f32 %v743, %v892
        %v900 = vmul.f32 %v746, %v892
        %v901 = vmul.f32 %v751, %v892
        %v902 = vmul.f32 %v754, %v892
        %v903 = vmul.f32 %v759, %v892
        %v904 = vmul.f32 %v762, %v892
        %v905 = vmul.f32 %v767, %v892
        %v906 = vmul.f32 %v770, %v892
        %v907 = vmul.f32 %v775, %v892
        %v908 = vmul.f32 %v778, %v892
        %v909 = vmul.f32 %v783, %v892
        %v910 = vmul.f32 %v786, %v892
        %v911 = vmul.f32 %v791, %v892
        %v912 = vmul.f32 %v794, %v892
        %v913 = vmul.f32 %v799, %v892
        %v914 = vmul.f32 %v802, %v892
        %v915 = vmul.f32 %v807, %v892
        %v916 = vmul.f32 %v810, %v892
        %v917 = vmul.f32 %v815, %v892
        %v918 = vld [vmem:[#allocation13] sm:$0x1]
        %v920 = vlaneseq
        %v921 = vshrl.u32 %v920, 7
        %v922 = vsub.s32 0, %v921
        %v923 = vrot.slane %v918, %v922
        %v925 = vadd.f32 %v893, %v923
        %v926 = vadd.f32 %v894, %v923
        %v927 = vadd.f32 %v895, %v923
        %v928 = vadd.f32 %v896, %v923
        %v929 = vadd.f32 %v897, %v923
        %v930 = vadd.f32 %v898, %v923
        %v931 = vadd.f32 %v899, %v923
        %v932 = vadd.f32 %v900, %v923
        %v933 = vadd.f32 %v901, %v923
        %v934 = vadd.f32 %v902, %v923
        %v935 = vadd.f32 %v903, %v923
        %v936 = vadd.f32 %v904, %v923
        %v937 = vadd.f32 %v905, %v923
        %v938 = vadd.f32 %v906, %v923
        %v939 = vadd.f32 %v907, %v923
        %v940 = vadd.f32 %v908, %v923
        %v941 = vadd.f32 %v909, %v923
        %v942 = vadd.f32 %v910, %v923
        %v943 = vadd.f32 %v911, %v923
        %v944 = vadd.f32 %v912, %v923
        %v945 = vadd.f32 %v913, %v923
        %v946 = vadd.f32 %v914, %v923
        %v947 = vadd.f32 %v915, %v923
        %v948 = vadd.f32 %v916, %v923
        %v949 = vadd.f32 %v917, %v923
        %vm950 = vcmp.ge.f32.partialorder %v925, 0.0
        %vm951 = vcmp.ge.f32.partialorder %v926, 0.0
        %vm952 = vcmp.ge.f32.partialorder %v927, 0.0
        %vm953 = vcmp.ge.f32.partialorder %v928, 0.0
        %vm954 = vcmp.ge.f32.partialorder %v929, 0.0
        %vm955 = vcmp.ge.f32.partialorder %v930, 0.0
        %vm956 = vcmp.ge.f32.partialorder %v931, 0.0
        %vm957 = vcmp.ge.f32.partialorder %v932, 0.0
        %vm958 = vcmp.ge.f32.partialorder %v933, 0.0
        %vm959 = vcmp.ge.f32.partialorder %v934, 0.0
        %vm960 = vcmp.ge.f32.partialorder %v935, 0.0
        %vm961 = vcmp.ge.f32.partialorder %v936, 0.0
        %vm962 = vcmp.ge.f32.partialorder %v937, 0.0
        %vm963 = vcmp.ge.f32.partialorder %v938, 0.0
        %vm964 = vcmp.ge.f32.partialorder %v939, 0.0
        %vm965 = vcmp.ge.f32.partialorder %v940, 0.0
        %vm966 = vcmp.ge.f32.partialorder %v941, 0.0
        %vm967 = vcmp.ge.f32.partialorder %v942, 0.0
        %vm968 = vcmp.ge.f32.partialorder %v943, 0.0
        %vm969 = vcmp.ge.f32.partialorder %v944, 0.0
        %vm970 = vcmp.ge.f32.partialorder %v945, 0.0
        %vm971 = vcmp.ge.f32.partialorder %v946, 0.0
        %vm972 = vcmp.ge.f32.partialorder %v947, 0.0
        %vm973 = vcmp.ge.f32.partialorder %v948, 0.0
        %vm974 = vcmp.ge.f32.partialorder %v949, 0.0
        %v975 = vmul.f32 %v925, 0.2
        %v976 = vmul.f32 %v926, 0.2
        %v977 = vmul.f32 %v927, 0.2
        %v978 = vmul.f32 %v928, 0.2
        %v979 = vmul.f32 %v929, 0.2
        %v980 = vmul.f32 %v930, 0.2
        %v981 = vmul.f32 %v931, 0.2
        %v982 = vmul.f32 %v932, 0.2
        %v983 = vmul.f32 %v933, 0.2
        %v984 = vmul.f32 %v934, 0.2
        %v985 = vmul.f32 %v935, 0.2
        %v986 = vmul.f32 %v936, 0.2
        %v987 = vmul.f32 %v937, 0.2
        %v988 = vmul.f32 %v938, 0.2
        %v989 = vmul.f32 %v939, 0.2
        %v990 = vmul.f32 %v940, 0.2
        %v991 = vmul.f32 %v941, 0.2
        %v992 = vmul.f32 %v942, 0.2
        %v993 = vmul.f32 %v943, 0.2
        %v994 = vmul.f32 %v944, 0.2
        %v995 = vmul.f32 %v945, 0.2
        %v996 = vmul.f32 %v946, 0.2
        %v997 = vmul.f32 %v947, 0.2
        %v998 = vmul.f32 %v948, 0.2
        %v999 = vmul.f32 %v949, 0.2
        %v1000 = vsel %vm950, %v925, %v975
        %v1001 = vsel %vm951, %v926, %v976
        %v1002 = vsel %vm952, %v927, %v977
        %v1003 = vsel %vm953, %v928, %v978
        %v1004 = vsel %vm954, %v929, %v979
        %v1005 = vsel %vm955, %v930, %v980
        %v1006 = vsel %vm956, %v931, %v981
        %v1007 = vsel %vm957, %v932, %v982
        %v1008 = vsel %vm958, %v933, %v983
        %v1009 = vsel %vm959, %v934, %v984
        %v1010 = vsel %vm960, %v935, %v985
        %v1011 = vsel %vm961, %v936, %v986
        %v1012 = vsel %vm962, %v937, %v987
        %v1013 = vsel %vm963, %v938, %v988
        %v1014 = vsel %vm964, %v939, %v989
        %v1015 = vsel %vm965, %v940, %v990
        %v1016 = vsel %vm966, %v941, %v991
        %v1017 = vsel %vm967, %v942, %v992
        %v1018 = vsel %vm968, %v943, %v993
        %v1019 = vsel %vm969, %v944, %v994
        %v1020 = vsel %vm970, %v945, %v995
        %v1021 = vsel %vm971, %v946, %v996
        %v1022 = vsel %vm972, %v947, %v997
        %v1023 = vsel %vm973, %v948, %v998
        %v1024 = vsel %vm974, %v949, %v999
        %v1025 = vmul.f32 %v1000, 1.4142135
        %v1026 = vmul.f32 %v1001, 1.4142135
        %v1027 = vmul.f32 %v1002, 1.4142135
        %v1028 = vmul.f32 %v1003, 1.4142135
        %v1029 = vmul.f32 %v1004, 1.4142135
        %v1030 = vmul.f32 %v1005, 1.4142135
        %v1031 = vmul.f32 %v1006, 1.4142135
        %v1032 = vmul.f32 %v1007, 1.4142135
        %v1033 = vmul.f32 %v1008, 1.4142135
        %v1034 = vmul.f32 %v1009, 1.4142135
        %v1035 = vmul.f32 %v1010, 1.4142135
        %v1036 = vmul.f32 %v1011, 1.4142135
        %v1037 = vmul.f32 %v1012, 1.4142135
        %v1038 = vmul.f32 %v1013, 1.4142135
        %v1039 = vmul.f32 %v1014, 1.4142135
        %v1040 = vmul.f32 %v1015, 1.4142135
        %v1041 = vmul.f32 %v1016, 1.4142135
        %v1042 = vmul.f32 %v1017, 1.4142135
        %v1043 = vmul.f32 %v1018, 1.4142135
        %v1044 = vmul.f32 %v1019, 1.4142135
        %v1045 = vmul.f32 %v1020, 1.4142135
        %v1046 = vmul.f32 %v1021, 1.4142135
        %v1047 = vmul.f32 %v1022, 1.4142135
        %v1048 = vmul.f32 %v1023, 1.4142135
        %v1049 = vmul.f32 %v1024, 1.4142135
        %1050 = vst [vmem:[%s414] sm:$0xff] %v1025
        %1051 = vst [vmem:[%s414 + $0x8] sm:$0xff] %v1026
        %1052 = vst [vmem:[%s414 + $0x10] sm:$0xff] %v1027
        %1053 = vst [vmem:[%s414 + $0x18] sm:$0xff] %v1028
        %1054 = vst [vmem:[%s414 + $0x20] sm:$0xff] %v1029
        %1055 = vst [vmem:[%s414 + $0x28] sm:$0xff] %v1030
        %1056 = vst [vmem:[%s414 + $0x30] sm:$0xff] %v1031
        %1057 = vst [vmem:[%s414 + $0x38] sm:$0xff] %v1032
        %1058 = vst [vmem:[%s414 + $0x40] sm:$0xff] %v1033
        %1059 = vst [vmem:[%s414 + $0x48] sm:$0xff] %v1034
        %1060 = vst [vmem:[%s414 + $0x50] sm:$0xff] %v1035
        %1061 = vst [vmem:[%s414 + $0x58] sm:$0xff] %v1036
        %1062 = vst [vmem:[%s414 + $0x60] sm:$0xff] %v1037
        %1063 = vst [vmem:[%s414 + $0x68] sm:$0xff] %v1038
        %1064 = vst [vmem:[%s414 + $0x70] sm:$0xff] %v1039
        %1065 = vst [vmem:[%s414 + $0x78] sm:$0xff] %v1040
        %1066 = vst [vmem:[%s414 + $0x80] sm:$0xff] %v1041
        %1067 = vst [vmem:[%s414 + $0x88] sm:$0xff] %v1042
        %1068 = vst [vmem:[%s414 + $0x90] sm:$0xff] %v1043
        %1069 = vst [vmem:[%s414 + $0x98] sm:$0xff] %v1044
        %1070 = vst [vmem:[%s414 + $0xa0] sm:$0xff] %v1045
        %1071 = vst [vmem:[%s414 + $0xa8] sm:$0xff] %v1046
        %1072 = vst [vmem:[%s414 + $0xb0] sm:$0xff] %v1047
        %1073 = vst [vmem:[%s414 + $0xb8] sm:$0xff] %v1048
        %1074 = vst [vmem:[%s414 + $0xc0] sm:$0xff] %v1049
        %s1075 = sand.u32 %s210, 1
        %s1076 = scalar_lea.sflag [#allocation4], %s1075
        %s1077 = sand.u32 %s210, 1
        %s1078 = smul.addr %s1077, 200
        %s1079 = scalar_lea.vmem [#allocation14], %s1078
        // Predicated region
        $region77: #{tpu_custom_call.1} parent=47 // pred_check
          %p1080 = pneg %p220
        $region78: #{tpu_custom_call.1} parent=47 // pred_check_branch
          %1082 = sbr.rel (%p1080) target = $region80
        $region79: #{tpu_custom_call.1} parent=47 // pred_region
          %s1083 = smul.u32 25, %s34
          %s1085 = ssub.s32 3200, 3200
          %1086 = vsyncadd %s1076, %s1085
          %s1087 = smul.addr %s33, 25
          %s1088 = sadd.s32 %s1083, %s1087
          %s1089 = smul.addr %s1088, 128
          %s1090 = scalar_lea.hbm %s7, %s1089
          %s1091 = sshll.u32 %s1079, 4
          %s1092 = int_to_ptr.vmem [resolvable:$true] %s1091
          %1097 = dma.vmem_to_hbm [thread:$0]  %s1092, 3200, %s1090, %s1076, 128, 128, 8
        $region80: #{tpu_custom_call.1} parent=47 // pred_fallthru
          _
      $region48: #{tpu_custom_call.1} parent=5 // pred_fallthru
        _
      %p1098 = scmp.le.s32.totalorder 2, %s24
      // Predicated region
      $region81: #{tpu_custom_call.1} parent=5 // pred_check
        %p1099 = pneg %p1098
      $region82: #{tpu_custom_call.1} parent=5 // pred_check_branch
        %1101 = sbr.rel (%p1099) target = $region84
      $region83: #{tpu_custom_call.1} parent=5 // pred_region
        %s1102 = ssub.s32 %s24, 2
        // Predicated region
        $region85: #{tpu_custom_call.1} parent=83 // pred_check
          %p1103 = pneg %p226
        $region86: #{tpu_custom_call.1} parent=83 // pred_check_branch
          %1105 = sbr.rel (%p1103) target = $region88
        $region87: #{tpu_custom_call.1} parent=83 // pred_region
          %s1106 = sand.u32 %s211, 1
          %s1107 = scalar_lea.sflag [#allocation4], %s1106
          %s1108 = sand.u32 %s211, 1
          %s1109 = smul.addr %s1108, 200
          %s1110 = scalar_lea.vmem [#allocation14], %s1109
          %1111 = dma.done %s1107, 3200
        $region88: #{tpu_custom_call.1} parent=83 // pred_fallthru
          _
      $region84: #{tpu_custom_call.1} parent=5 // pred_fallthru
        _
    $region6: #{tpu_custom_call.1} parent=1 // loop_footer
      %s28 = sadd.s32 1, %s24
    $region7: #{tpu_custom_call.1} parent=1 // loop_footer_branch
      %23 = sbr.rel target = $region3
    $region8: #{tpu_custom_call.1} parent=1 // loop_exit
      _
    %1112 = vsyncpa [#allocation3], 1
    %s1113 = scalar_lea.sflag [#allocation3], 1
    %1114 = vsyncpa %s1113, 1
    %1115 = vsyncpa [#allocation6], 1
    %s1116 = scalar_lea.sflag [#allocation6], 1
    %1117 = vsyncpa %s1116, 1
    %1118 = vsyncpa [#allocation9], 1
    %1119 = vsyncpa [#allocation12], 1
    %1120 = vsyncpa [#allocation4], 1
    %s1121 = scalar_lea.sflag [#allocation4], 1
    %1122 = vsyncpa %s1121, 1

</llo_original>
